<compile_context>
chip_gen: v5e
topology: v5e:2x2
jax: 0.10.0
libtpu: 0.0.40
codegen_flags: <defaults>
</compile_context>

<pallas_src>
import math

import jax
import jax.numpy as jnp
from jax.experimental import pallas as pl
from jax.experimental.pallas import tpu as pltpu


def _round_up(x, m):
    return ((x + m - 1) // m) * m


def _sublane_pack(dtype):
    # 8 rows for 32-bit, 16 for 16-bit, 32 for 8-bit dtypes.
    return max(8, 32 // jnp.dtype(dtype).itemsize)


# --------------------------------------------------------------------------
# Pallas kernel: out_tile = q_tile @ weighted_mask   (weight already folded)
# --------------------------------------------------------------------------
def locality_mask_kernel(q_ref, wmask_ref, o_ref):
    o_ref[...] = jnp.dot(
        q_ref[...], wmask_ref[...], preferred_element_type=jnp.float32
    ).astype(o_ref.dtype)


def _pick_row_tile(M, tm_max, pack):
    """Largest row tile <= tm_max (multiple of `pack`) that doesn't over-pad
    tiny inputs, shrunk so the grid has >= 2 steps when M allows (v7x: lets the
    'parallel' M axis shard across both TensorCores)."""
    tm_eff = min(tm_max, _round_up(M, pack))
    if pl.cdiv(M, tm_eff) == 1 and M > pack:
        tm_eff = _round_up(pl.cdiv(M, 2), pack)
    return tm_eff


def locality_mask_matmul(q2, wmask, *, tm=1024):
    """q2: (M, H), wmask: (H, Hn) — learned weight already folded into wmask."""
    M, H = q2.shape
    Hm, Hn = wmask.shape
    assert Hm == H, "queries / mask hidden dim mismatch"
    assert wmask.dtype == q2.dtype, "mask must be pre-cast to the query dtype"

    dsize = jnp.dtype(q2.dtype).itemsize
    pack = _sublane_pack(q2.dtype)
    tm_eff = _pick_row_tile(M, tm, pack)
    grid = (pl.cdiv(M, tm_eff),)  # partial last block handled by Pallas masking

    cost = pl.CostEstimate(
        flops=2 * M * H * Hn,
        transcendentals=0,
        bytes_accessed=(M * H + M * Hn + H * Hn) * dsize,
    )

    # Scoped-VMEM budget from the actual tile footprint: double-buffered q and
    # out tiles, single-buffered resident mask, f32-accumulator headroom.
    # Only override the default scoped limit when actually needed (v7x: 64 MiB
    # physical VMEM, so blanket-raising the limit just burns headroom).
    vmem_needed = (2 * tm_eff * H * dsize        # q tile, double-buffered
                   + 2 * tm_eff * Hn * dsize     # out tile, double-buffered
                   + H * Hn * dsize              # resident mask, single-buffered
                   + tm_eff * Hn * 4)            # f32 accumulate headroom
    vmem_limit = None
    if vmem_needed + (2 << 20) > 32 * 1024 * 1024:
        vmem_limit = min(int(vmem_needed * 1.5), 96 * 1024 * 1024)

    # TODO(synk): for very large hidden sizes (H*H*dsize approaching v7x's
    # 64 MiB VMEM) the resident mask should be K/N-tiled with a VMEM
    # accumulator instead of held whole; not needed at these shapes.
    return pl.pallas_call(
        locality_mask_kernel,
        out_shape=jax.ShapeDtypeStruct((M, Hn), q2.dtype),
        grid_spec=pltpu.PrefetchScalarGridSpec(
            num_scalar_prefetch=0,
            grid=grid,
            in_specs=[
                # Streamed query tile at native H (legal: equals the full dim).
                pl.BlockSpec((tm_eff, H), lambda i: (i, 0)),
                # Resident weighted mask: constant index_map -> single buffer.
                pl.BlockSpec((H, Hn), lambda i: (0, 0),
                             pipeline_mode=pl.Buffered(1)),
            ],
            out_specs=pl.BlockSpec((tm_eff, Hn), lambda i: (i, 0)),
        ),
        compiler_params=pltpu.CompilerParams(
            dimension_semantics=("parallel",),
            vmem_limit_bytes=vmem_limit,
        ),
        cost_estimate=cost,
    )(q2, wmask)


# --------------------------------------------------------------------------
# Module-equivalent wrapper (parameter setup / glue in plain JAX)
# --------------------------------------------------------------------------
def make_circular_locality_mask(hidden_size, width, wrap=True):
    """Deterministic stand-in for Constraints(hidden_size, width, wrap).circular():
    units laid out on a sqrt(H) x sqrt(H) grid; mask[i, j] = 1 if (wrapped)
    euclidean distance <= width * side."""
    # TODO(synk): only the 'circular' mask_type of the Constraints class is
    # modeled here; other mask types have no in-script equivalent.
    side = int(round(math.sqrt(hidden_size)))
    assert side * side == hidden_size, "hidden_size must be a perfect square"
    ii, jj = jnp.meshgrid(jnp.arange(side), jnp.arange(side), indexing="ij")
    coords = jnp.stack([ii.reshape(-1), jj.reshape(-1)], axis=-1).astype(jnp.float32)
    d = jnp.abs(coords[:, None, :] - coords[None, :, :])
    if wrap:
        d = jnp.minimum(d, side - d)
    dist = jnp.sqrt((d ** 2).sum(-1))
    return (dist <= width * side).astype(jnp.float32)


class LocalityMaskPallas:
    def __init__(self, hidden_size=64, width=0.3, wrap=True,
                 local_querying=False, learned_spatial_querying=True,
                 mask_type="circular", normalize_mask=True, key=None):
        self.local_querying = local_querying
        self.learned_spatial_querying = learned_spatial_querying
        self.normalize_queries = normalize_mask
        self.width = width
        self.hidden_size = hidden_size
        if not local_querying:
            mask = make_circular_locality_mask(hidden_size, width, wrap)
            if normalize_mask:
                mask = mask / jnp.linalg.norm(mask)  # Frobenius norm (torch.norm)
            self.locality_mask = mask
            if learned_spatial_querying:
                key = key if key is not None else jax.random.PRNGKey(0)
                self.locality_weight = jax.random.normal(
                    key, (hidden_size,), dtype=jnp.float32)
            else:
                self.locality_weight = jnp.ones((hidden_size,), dtype=jnp.float32)

            # Fold the learned column weight into the constant mask ONCE, in
            # f32 (matches the torch forward's `mask * weight` broadcast).
            self._weighted_mask_f32 = (
                self.locality_mask * self.locality_weight[None, :])
            # Per-activation-dtype cast cache (hoisted out of the hot path).
            self._wmask_by_dtype = {}

    def _weighted_mask(self, dtype):
        dt = jnp.dtype(dtype)
        w = self._wmask_by_dtype.get(dt)
        if w is None:
            w = self._weighted_mask_f32.astype(dt)
            self._wmask_by_dtype[dt] = w
        return w

    def __call__(self, queries):
        if self.width == -1 or self.local_querying:
            return queries
        B, S, H = queries.shape
        q2 = queries.reshape(B * S, H)
        out = locality_mask_matmul(q2, self._weighted_mask(queries.dtype))
        return out.reshape(B, S, H)


# --------------------------------------------------------------------------
if __name__ == "__main__":
    batch, seq, hidden = 2, 8, 64  # hidden must be a perfect square (8x8 grid)

    root = jax.random.PRNGKey(0)
    k_q, k_w = jax.random.split(root)

    queries = jax.random.normal(k_q, (batch, seq, hidden), dtype=jnp.float32)

    module = LocalityMaskPallas(
        hidden_size=hidden, width=0.3, wrap=True,
        local_querying=False, learned_spatial_querying=True,
        mask_type="circular", normalize_mask=True, key=k_w,
    )

    out = jax.block_until_ready(module(queries))

    # Pure-JAX reference of the exact forward semantics.
    ref_mask = module.locality_mask * module.locality_weight[None, :]
    ref = jnp.matmul(queries, ref_mask)

    assert out.shape == queries.shape
    assert jnp.allclose(out, ref, atol=1e-5, rtol=1e-5), "mismatch vs reference"

    print("KERNEL_OK")
</pallas_src>

<mosaic_0001>
module attributes {stable_mosaic.version = 11 : i64} {
  func.func @locality_mask_kernel(%arg0: i32, %arg1: memref<8x64xf32, #tpu.memory_space<vmem>>, %arg2: memref<64x64xf32, #tpu.memory_space<vmem>>, %arg3: memref<8x64xf32, #tpu.memory_space<vmem>>) attributes {dimension_semantics = [#tpu.dimension_semantics<parallel>], iteration_bounds = array<i64: 2>, scalar_prefetch = 0 : i64, scratch_operands = 0 : i64, tpu.core_type = #tpu.core_type<tc>, window_params = [{transform_indices = @transform_0, window_bounds = array<i64: 8, 64>}, {pipeline_mode = #tpu.pipeline_mode<synchronous>, transform_indices = @transform_1, window_bounds = array<i64: 64, 64>}, {transform_indices = @transform_2, window_bounds = array<i64: 8, 64>}]} {
    %c0 = arith.constant 0 : index
    %c0_0 = arith.constant 0 : index
    %0 = vector.load %arg1[%c0, %c0_0] : memref<8x64xf32, #tpu.memory_space<vmem>>, vector<8x64xf32>
    %c0_1 = arith.constant 0 : index
    %c0_2 = arith.constant 0 : index
    %1 = vector.load %arg2[%c0_1, %c0_2] : memref<64x64xf32, #tpu.memory_space<vmem>>, vector<64x64xf32>
    %cst = arith.constant dense<0.000000e+00> : vector<8x64xf32>
    %2 = tpu.matmul %0, %1, %cst {dimension_numbers = #tpu.dot_dimension_numbers<[1], [0], [0], [1], [0, 0, 1, 1], [], []>} : vector<8x64xf32>, vector<64x64xf32>, vector<8x64xf32> -> vector<8x64xf32>
    %c0_3 = arith.constant 0 : index
    %c0_4 = arith.constant 0 : index
    %3 = vector.load %arg3[%c0_3, %c0_4] : memref<8x64xf32, #tpu.memory_space<vmem>>, vector<8x64xf32>
    tpu.vector_store %arg3[%c0_3, %c0_4], %2 {strides = array<i32>} : memref<8x64xf32, #tpu.memory_space<vmem>>, vector<8x64xf32>,
    return
  }
  func.func @transform_0(%arg0: i32) -> (i32, i32) {
    %c0_i32 = arith.constant 0 : i32
    %c0_i32_0 = arith.constant 0 : i32
    return %arg0, %c0_i32 : i32, i32
  }
  func.func @transform_1(%arg0: i32) -> (i32, i32) {
    %c0_i32 = arith.constant 0 : i32
    %c0_i32_0 = arith.constant 0 : i32
    %c0_i32_1 = arith.constant 0 : i32
    return %c0_i32, %c0_i32_0 : i32, i32
  }
  func.func @transform_2(%arg0: i32) -> (i32, i32) {
    %c0_i32 = arith.constant 0 : i32
    %c0_i32_0 = arith.constant 0 : i32
    return %arg0, %c0_i32 : i32, i32
  }
}

</mosaic_0001>

<llo_original>
// kernel: tpu_custom_call.1
$region0: #{tpu_custom_call.1}
  #allocation0 [shape = 'u32[]', space=smem, size = 0x4, offset = 0x4, fixed_abs, tag = 'smem constant byte address 0x4 - core index']
  #allocation1 [shape = 'u32[72,128]{1,0:T(1,128)}', space=vmem, size = 0x9000, scoped, tag = 'internal scratch']
  %s0 = inlined_call_operand.hbm [shape: f32[16,64], index: 0, kind: input, shape index: {}]
  %s1 = inlined_call_operand.hbm [shape: f32[64,64], index: 1, kind: input, shape index: {}]
  %s2 = inlined_call_operand.hbm [shape: f32[16,64], index: 2, kind: output, shape index: {}]
  %s3 = sld [smem:[#allocation0]]
  $region49: #{tpu_custom_call.1} parent=0
    _
  %s5 = ssub.s32 1, %s3
  %s6 = scalar_select 0, %s5, %s3
  $region1: #{tpu_custom_call.1} parent=0
    #allocation2 [shape = 'u8[8192]{0}', space=vmem, size = 0x2000, scoped, tag = 'input window, operand 0']
    #allocation3 [shape = 's32[2]{0}', space=sflag, size = 0x8, scoped, tag = 'scoped memory for tpu_custom_call.1']
    #allocation4 [shape = 's32[2]{0}', space=sflag, size = 0x8, scoped, tag = 'scoped memory for tpu_custom_call.1']
    #allocation5 [shape = 'u8[32768]{0}', space=vmem, size = 0x8000, scoped, tag = 'input window, operand 1, single buffered']
    #allocation6 [shape = 's32[1]{0}', space=sflag, size = 0x4, scoped, tag = 'scoped memory for tpu_custom_call.1']
    #allocation7 [shape = 'u8[8192]{0}', space=vmem, size = 0x2000, scoped, tag = 'output window, operand 0']
    %7 = vsyncpa [#allocation3], 0
    %s8 = scalar_lea.sflag [#allocation3], 1
    %9 = vsyncpa %s8, 0
    %10 = vsyncpa [#allocation6], 0
    %11 = vsyncpa [#allocation4], 0
    %s12 = scalar_lea.sflag [#allocation4], 1
    %13 = vsyncpa %s12, 0
    loop: start=0, step=1, limit=4
    $region2: #{tpu_custom_call.1} parent=1 // loop_pre_header
      _
    $region3: #{tpu_custom_call.1} parent=1 // loop_header
      %s15 = sphi 0, %s19
      %p16 = scmp.ge.s32.totalorder %s15, 4
      %s25 = sphi 0, %s27
      %s28 = sphi 0, %s25
      %s29 = sphi 0, %s28
      %s45 = sphi 0, %s29
      %s49 = sphi 0, %s49
      %s51 = sphi 0, %s49
      %s52 = sphi 0, %s51
      %s66 = sphi 0, %s52
      %s72 = sphi 0, %s74
      %s75 = sphi 0, %s72
      %s76 = sphi 0, %s75
      %s92 = sphi 0, %s76
    $region4: #{tpu_custom_call.1} parent=1 // loop_header_branch
      %18 = sbr.rel (%p16) target = $region8
    $region5: #{tpu_custom_call.1} parent=1 // loop_body
      %s20 = ssub.s32 %s15, 1
      %s21 = ssub.s32 %s15, 2
      %s22 = sadd.s32 %s15, 1
      %s23 = ssub.s32 %s15, %s22
      %p24 = scmp.eq.s32.totalorder %s23, 0
      %s26 = sadd.s32 %s25, 1
      %s27 = scalar_select %p24, %s25, %s26
      %p30 = pneg %p24
      %p31 = scmp.eq.s32.totalorder %s15, 1
      %p32 = por %p30, %p31
      %p33 = scmp.ne.s32.totalorder %s25, %s28
      %p34 = scmp.eq.s32.totalorder %s15, 0
      %p35 = por %p33, %p34
      %p36 = scmp.ne.s32.totalorder %s25, %s28
      %p37 = scmp.eq.s32.totalorder %s20, 1
      %p38 = por %p36, %p37
      %p39 = scmp.ne.s32.totalorder %s28, %s29
      %p40 = scmp.eq.s32.totalorder %s20, 0
      %p41 = por %p39, %p40
      %p42 = scmp.ne.s32.totalorder %s28, %s29
      %p43 = scmp.eq.s32.totalorder %s21, 1
      %p44 = por %p42, %p43
      %p46 = scmp.ne.s32.totalorder %s29, %s45
      %p47 = scmp.eq.s32.totalorder %s21, 0
      %p48 = por %p46, %p47
      %s50 = sadd.s32 %s49, 1
      %p53 = scmp.eq.s32.totalorder %s15, 1
      %p54 = scmp.ne.s32.totalorder %s49, %s51
      %p55 = scmp.eq.s32.totalorder %s15, 0
      %p56 = por %p54, %p55
      %p57 = scmp.ne.s32.totalorder %s49, %s51
      %p58 = scmp.eq.s32.totalorder %s20, 1
      %p59 = por %p57, %p58
      %p60 = scmp.ne.s32.totalorder %s51, %s52
      %p61 = scmp.eq.s32.totalorder %s20, 0
      %p62 = por %p60, %p61
      %p63 = scmp.ne.s32.totalorder %s51, %s52
      %p64 = scmp.eq.s32.totalorder %s21, 1
      %p65 = por %p63, %p64
      %p67 = scmp.ne.s32.totalorder %s52, %s66
      %p68 = scmp.eq.s32.totalorder %s21, 0
      %p69 = por %p67, %p68
      %s70 = ssub.s32 %s15, %s22
      %p71 = scmp.eq.s32.totalorder %s70, 0
      %s73 = sadd.s32 %s72, 1
      %s74 = scalar_select %p71, %s72, %s73
      %p77 = pneg %p71
      %p78 = scmp.eq.s32.totalorder %s15, 1
      %p79 = por %p77, %p78
      %p80 = scmp.ne.s32.totalorder %s72, %s75
      %p81 = scmp.eq.s32.totalorder %s15, 0
      %p82 = por %p80, %p81
      %p83 = scmp.ne.s32.totalorder %s72, %s75
      %p84 = scmp.eq.s32.totalorder %s20, 1
      %p85 = por %p83, %p84
      %p86 = scmp.ne.s32.totalorder %s75, %s76
      %p87 = scmp.eq.s32.totalorder %s20, 0
      %p88 = por %p86, %p87
      %p89 = scmp.ne.s32.totalorder %s75, %s76
      %p90 = scmp.eq.s32.totalorder %s21, 1
      %p91 = por %p89, %p90
      %p93 = scmp.ne.s32.totalorder %s76, %s92
      %p94 = scmp.eq.s32.totalorder %s21, 0
      %p95 = por %p93, %p94
      %p96 = scmp.le.s32.totalorder 1, %s15
      %p97 = scmp.lt.s32.totalorder %s15, 3
      %p98 = pnand %p96, %p97
      %p99 = pneg %p98
      // Predicated region
      $region9: #{tpu_custom_call.1} parent=5 // pred_check
        _
      $region10: #{tpu_custom_call.1} parent=5 // pred_check_branch
        %101 = sbr.rel (%p98) target = $region12
      $region11: #{tpu_custom_call.1} parent=5 // pred_region
        %s102 = ssub.s32 %s15, 1
        // Predicated region
        $region13: #{tpu_custom_call.1} parent=11 // pred_check
          %p103 = pneg %p62
        $region14: #{tpu_custom_call.1} parent=11 // pred_check_branch
          %105 = sbr.rel (%p103) target = $region16
        $region15: #{tpu_custom_call.1} parent=11 // pred_region
          %107 = vsyncadd [#allocation6], 0
          %s108 = sshll.u32 %s1, 4
          %s109 = int_to_ptr.hbm [resolvable:$true] %s108
          %s110 = sshll.u32 [#allocation5], 4
          %s111 = int_to_ptr.vmem [resolvable:$true] %s110
          %116 = dma.hbm_to_vmem [thread:$0]  %s109, 1024, %s111, [#allocation6], 128, 128, 8
        $region16: #{tpu_custom_call.1} parent=11 // pred_fallthru
          _
      $region12: #{tpu_custom_call.1} parent=5 // pred_fallthru
        _
      %p117 = scmp.lt.s32.totalorder %s15, 2
      // Predicated region
      $region17: #{tpu_custom_call.1} parent=5 // pred_check
        %p118 = pneg %p117
      $region18: #{tpu_custom_call.1} parent=5 // pred_check_branch
        %120 = sbr.rel (%p118) target = $region20
      $region19: #{tpu_custom_call.1} parent=5 // pred_region
        // Predicated region
        $region21: #{tpu_custom_call.1} parent=19 // pred_check
          %p121 = pneg %p35
        $region22: #{tpu_custom_call.1} parent=19 // pred_check_branch
          %123 = sbr.rel (%p121) target = $region24
        $region23: #{tpu_custom_call.1} parent=19 // pred_region
          %s124 = sand.u32 %s25, 1
          %s125 = scalar_lea.sflag [#allocation3], %s124
          %s126 = sand.u32 %s25, 1
          %s127 = smul.addr %s126, 8
          %s128 = scalar_lea.vmem [#allocation2], %s127
          %130 = vsyncadd %s125, 0
          %s131 = smul.addr %s15, 8
          %s132 = scalar_lea.hbm %s0, %s131
          %s134 = sshll.u32 %s132, 4
          %s135 = int_to_ptr.hbm [resolvable:$true] %s134
          %s136 = sshll.u32 %s128, 4
          %s137 = int_to_ptr.vmem [resolvable:$true] %s136
          %139 = dma.hbm_to_vmem [thread:$0]  %s135, 128, %s137, %s125
        $region24: #{tpu_custom_call.1} parent=19 // pred_fallthru
          _
      $region20: #{tpu_custom_call.1} parent=5 // pred_fallthru
        _
      %p140 = scmp.le.s32.totalorder 1, %s15
      %p141 = scmp.lt.s32.totalorder %s15, 3
      %p142 = pnand %p140, %p141
      %p143 = pneg %p142
      // Predicated region
      $region25: #{tpu_custom_call.1} parent=5 // pred_check
        _
      $region26: #{tpu_custom_call.1} parent=5 // pred_check_branch
        %145 = sbr.rel (%p142) target = $region28
      $region27: #{tpu_custom_call.1} parent=5 // pred_region
        %s146 = ssub.s32 %s15, 1
        %s147 = sand.u32 %s28, 1
        %s148 = scalar_lea.sflag [#allocation3], %s147
        %s149 = sand.u32 %s28, 1
        %s150 = smul.addr %s149, 8
        %s151 = scalar_lea.vmem [#allocation2], %s150
        // Predicated region
        $region29: #{tpu_custom_call.1} parent=27 // pred_check
          %p152 = pneg %p41
        $region30: #{tpu_custom_call.1} parent=27 // pred_check_branch
          %154 = sbr.rel (%p152) target = $region32
        $region31: #{tpu_custom_call.1} parent=27 // pred_region
          %156 = dma.done %s148, 128
        $region32: #{tpu_custom_call.1} parent=27 // pred_fallthru
          _
        // Predicated region
        $region33: #{tpu_custom_call.1} parent=27 // pred_check
          %p157 = pneg %p62
        $region34: #{tpu_custom_call.1} parent=27 // pred_check_branch
          %159 = sbr.rel (%p157) target = $region36
        $region35: #{tpu_custom_call.1} parent=27 // pred_region
          %161 = dma.done [#allocation6], 1024
        $region36: #{tpu_custom_call.1} parent=27 // pred_fallthru
          _
        %s162 = sand.u32 %s28, 1
        %s163 = scalar_lea.sflag [#allocation3], %s162
        %s164 = sand.u32 %s28, 1
        %s165 = smul.addr %s164, 8
        %s166 = scalar_lea.vmem [#allocation2], %s165
        %p167 = pneg %p41
        %p168 = pneg %p38
        %p169 = pneg %p62
        %p170 = pneg %p59
        %p171 = pneg %p88
        %p172 = pneg %p85
        %s173 = sand.u32 %s75, 1
        %s174 = scalar_lea.sflag [#allocation4], %s173
        %s175 = sand.u32 %s75, 1
        %s176 = smul.addr %s175, 8
        %s177 = scalar_lea.vmem [#allocation7], %s176
        %v178 = vld [vmem:[%s151] sm:$0xff]
        %v179 = vld [vmem:[#allocation5] sm:$0xff]
        %v180 = vld [vmem:[#allocation5 + $0x8] sm:$0xff]
        %v181 = vld [vmem:[#allocation5 + $0x10] sm:$0xff]
        %v182 = vld [vmem:[#allocation5 + $0x18] sm:$0xff]
        %v183 = vld [vmem:[#allocation5 + $0x20] sm:$0xff]
        %v184 = vld [vmem:[#allocation5 + $0x28] sm:$0xff]
        %v185 = vld [vmem:[#allocation5 + $0x30] sm:$0xff]
        %v186 = vld [vmem:[#allocation5 + $0x38] sm:$0xff]
        %vm187 = vcmask 523264
        %v189 = vsel %vm187, %v178, 0
        %191 = vmatpush.msra.mxu0 0.0
        %192 = vmatpush.msra.mxu0 0.0
        %193 = vmatpush.msra.mxu0 0.0
        %194 = vmatpush.msra.mxu0 0.0
        %195 = vmatpush.msra.mxu0 0.0
        %196 = vmatpush.msra.mxu0 0.0
        %197 = vmatpush.msra.mxu0 0.0
        %198 = vmatpush.msra.mxu0 0.0
        %199 = vmatpush.msra.mxu0 %v186
        %200 = vmatpush.msra.mxu0 %v185
        %201 = vmatpush.msra.mxu0 %v184
        %202 = vmatpush.msra.mxu0 %v183
        %203 = vmatpush.msra.mxu0 %v182
        %204 = vmatpush.msra.mxu0 %v181
        %205 = vmatpush.msra.mxu0 %v180
        %206 = vmatpush.msra.mxu0 %v179
        %207 = vmatmul.f32.gmra.mxu0 %v189
        %v208 = vpop.f32.mrf.mxu0
        %v209 = vadd.f32 0.0, %v208
        %210 = vdwg.mxu0
        %211 = vst.msk [vmem:[%s177] sm:$0xff] %vm187, %v209
        %s212 = sand.u32 %s75, 1
        %s213 = scalar_lea.sflag [#allocation4], %s212
        %s214 = sand.u32 %s75, 1
        %s215 = smul.addr %s214, 8
        %s216 = scalar_lea.vmem [#allocation7], %s215
        // Predicated region
        $region37: #{tpu_custom_call.1} parent=27 // pred_check
          %p217 = pneg %p85
        $region38: #{tpu_custom_call.1} parent=27 // pred_check_branch
          %219 = sbr.rel (%p217) target = $region40
        $region39: #{tpu_custom_call.1} parent=27 // pred_region
          %221 = vsyncadd %s213, 0
          %s222 = smul.addr %s20, 8
          %s223 = scalar_lea.hbm %s2, %s222
          %s225 = sshll.u32 %s216, 4
          %s226 = int_to_ptr.vmem [resolvable:$true] %s225
          %s227 = sshll.u32 %s223, 4
          %s228 = int_to_ptr.hbm [resolvable:$true] %s227
          %230 = dma.vmem_to_hbm [thread:$0]  %s226, 128, %s228, %s213
        $region40: #{tpu_custom_call.1} parent=27 // pred_fallthru
          _
      $region28: #{tpu_custom_call.1} parent=5 // pred_fallthru
        _
      %p231 = scmp.le.s32.totalorder 2, %s15
      // Predicated region
      $region41: #{tpu_custom_call.1} parent=5 // pred_check
        %p232 = pneg %p231
      $region42: #{tpu_custom_call.1} parent=5 // pred_check_branch
        %234 = sbr.rel (%p232) target = $region44
      $region43: #{tpu_custom_call.1} parent=5 // pred_region
        %s235 = ssub.s32 %s15, 2
        // Predicated region
        $region45: #{tpu_custom_call.1} parent=43 // pred_check
          %p236 = pneg %p91
        $region46: #{tpu_custom_call.1} parent=43 // pred_check_branch
          %238 = sbr.rel (%p236) target = $region48
        $region47: #{tpu_custom_call.1} parent=43 // pred_region
          %s239 = sand.u32 %s76, 1
          %s240 = scalar_lea.sflag [#allocation4], %s239
          %s241 = sand.u32 %s76, 1
          %s242 = smul.addr %s241, 8
          %s243 = scalar_lea.vmem [#allocation7], %s242
          %245 = dma.done %s240, 128
        $region48: #{tpu_custom_call.1} parent=43 // pred_fallthru
          _
      $region44: #{tpu_custom_call.1} parent=5 // pred_fallthru
        _
    $region6: #{tpu_custom_call.1} parent=1 // loop_footer
      %s19 = sadd.s32 1, %s15
    $region7: #{tpu_custom_call.1} parent=1 // loop_footer_branch
      %14 = sbr.rel target = $region3
    $region8: #{tpu_custom_call.1} parent=1 // loop_exit
      _
    %246 = vsyncpa [#allocation3], 1
    %s247 = scalar_lea.sflag [#allocation3], 1
    %248 = vsyncpa %s247, 1
    %249 = vsyncpa [#allocation6], 1
    %250 = vsyncpa [#allocation4], 1
    %s251 = scalar_lea.sflag [#allocation4], 1
    %252 = vsyncpa %s251, 1

</llo_original>
